<compile_context>
chip_gen: v7x
topology: tpu7x:2x2x1
jax: 0.10.0
libtpu: 0.0.40
codegen_flags: <defaults>
</compile_context>

<pallas_src>
import numpy as np

import jax
import jax.numpy as jnp
from jax import lax
from jax.experimental import pallas as pl
from jax.experimental.pallas import tpu as pltpu


def _round_up(n, m):
    return ((n + m - 1) // m) * m


# ----------------------------------------------------------------------------
# Kernel: full hot path (3x Linear+ReLU, 1x Linear) fused per batch tile.
# All intermediates are (H, bm): hidden on sublanes, batch on lanes.
# ----------------------------------------------------------------------------
def _mlp_kernel(x_ref, w1t_ref, wh_ref, w4p_ref, bcol_ref, o_ref):
    f32 = jnp.float32
    cdt = w1t_ref.dtype                     # compute dtype (f32 or bf16)

    x = x_ref[...]                          # (bm, in_dim), input dtype
    if x.dtype != cdt:
        x = x.astype(cdt)                   # in-kernel cast; x read HBM once

    b1 = bcol_ref[:, 0:1]                   # (H, 1) f32, broadcast over lanes
    b2 = bcol_ref[:, 1:2]
    b3 = bcol_ref[:, 2:3]
    b4 = bcol_ref[0:1, 3:4]                 # (1, 1) f32

    # Layer 1: W1^T (H,in) . x (bm,in)^T -> (H, bm). Batch on the lane axis.
    # MXU accumulates in f32; bias-add / ReLU stay f32 (v5e VPU has no bf16).
    h = lax.dot_general(
        w1t_ref[...], x,
        dimension_numbers=(((1,), (1,)), ((), ())),
        preferred_element_type=f32) + b1
    h = jnp.maximum(h, 0.0)
    # Dropout == identity in eval mode.
    h = jnp.dot(wh_ref[0], h.astype(cdt), preferred_element_type=f32) + b2
    h = jnp.maximum(h, 0.0)
    h = jnp.dot(wh_ref[1], h.astype(cdt), preferred_element_type=f32) + b3
    h = jnp.maximum(h, 0.0)

    # Final Linear(H, 1): w4^T padded to one 8-row sublane tile; row 0 holds
    # the real weights, rows 1..7 are zero.  Result (8, bm); keep row 0.
    out8 = jnp.dot(w4p_ref[...], h.astype(cdt), preferred_element_type=f32)
    out = out8[0:1, :] + b4                 # (1, bm), lane-dense
    o_ref[...] = out.reshape(o_ref.shape).astype(o_ref.dtype)


# ----------------------------------------------------------------------------
# Wrapper helpers
# ----------------------------------------------------------------------------
def _pack_params(params, compute_dtype):
    """Pack 4x(W,b) into (w1t, wh, w4p, bcol) laid out for the (H,bm) chain."""
    (w1, b1), (w2, b2), (w3, b3), (w4, b4) = params
    hidden = w1.shape[1]
    assert w2.shape == (hidden, hidden) and w3.shape == (hidden, hidden)
    assert w4.shape == (hidden, 1), "kernel specialises output_dim == 1"

    w1t = jnp.asarray(w1, jnp.float32).T.astype(compute_dtype)          # (H, in)
    wh = jnp.stack([jnp.asarray(w2, jnp.float32).T,
                    jnp.asarray(w3, jnp.float32).T]).astype(compute_dtype)  # (2,H,H)
    w4p = (jnp.zeros((8, hidden), jnp.float32)
           .at[0, :].set(jnp.reshape(w4, (-1,)))
           .astype(compute_dtype))                                       # (8, H)

    b4_col = (jnp.zeros((hidden,), jnp.float32)
              .at[0].set(jnp.reshape(b4, (-1,))[0]))
    bcol = jnp.stack([jnp.reshape(b1, (-1,)).astype(jnp.float32),
                      jnp.reshape(b2, (-1,)).astype(jnp.float32),
                      jnp.reshape(b3, (-1,)).astype(jnp.float32),
                      b4_col], axis=1)                                   # (H, 4) f32
    return w1t, wh, w4p, bcol


def _pick_bm(batch, input_dim, x_itemsize):
    # Big batch tiles amortise the ~0.35us/step fixed overhead. Batch rides the
    # lane axis, so per-step VMEM is mostly the double-buffered x tile plus a
    # few (16, bm) f32 temporaries.  Budget ~8 MiB for 2x x tiles (safe on
    # v7x's 32 MiB scoped / 64 MiB physical VMEM).  Keep an even tile count
    # (>=2) when the batch is big enough so v7x's two TCs split cleanly.
    cap = ((8 << 20) // (2 * max(input_dim, 1) * x_itemsize)) // 128 * 128
    cap = int(max(128, min(cap, 32768)))
    if batch <= 128:
        return 128
    if batch <= 256:
        return 256
    tiles = max(2, int(pl.cdiv(batch, cap)))
    if tiles % 2:
        tiles += 1
    bm = _round_up(int(pl.cdiv(batch, tiles)), 128)
    return int(min(bm, cap))


def classifier_forward(x, params, *, bm=None, compute_dtype=jnp.float32):
    """x: [B, input_dim]. params: 4x (W [in,out], b [1,out]). Returns [B] f32."""
    B, input_dim = x.shape
    w1t, wh, w4p, bcol = _pack_params(params, compute_dtype)
    hidden = w1t.shape[0]

    if bm is None:
        bm = _pick_bm(B, input_dim, x.dtype.itemsize)
    bm = _round_up(int(bm), 128)
    num_tiles = int(pl.cdiv(B, bm))

    # Advisory cost: the kernel is HBM-bound on the x read.
    wdt = np.dtype(compute_dtype).itemsize
    flops = 2 * B * (input_dim * hidden + 2 * hidden * hidden + hidden)
    bytes_accessed = int(
        B * input_dim * x.dtype.itemsize            # x read
        + num_tiles * bm * 4                        # output write (f32 slab)
        + (hidden * input_dim + 2 * hidden * hidden + 8 * hidden) * wdt
        + hidden * 4 * 4)                           # biases
    cost = pl.CostEstimate(flops=flops, transcendentals=0,
                           bytes_accessed=bytes_accessed)

    out = pl.pallas_call(
        _mlp_kernel,
        out_shape=jax.ShapeDtypeStruct((num_tiles, 1, bm), jnp.float32),
        grid_spec=pltpu.PrefetchScalarGridSpec(
            num_scalar_prefetch=0,
            grid=(num_tiles,),
            in_specs=[
                # Last (ragged) block may read past B: rows are independent and
                # the [:B] slice below discards them (no cross-row reduction).
                pl.BlockSpec((bm, input_dim), lambda i: (i, 0)),          # x tile
                pl.BlockSpec((hidden, input_dim), lambda i: (0, 0)),      # w1^T
                pl.BlockSpec((2, hidden, hidden), lambda i: (0, 0, 0)),   # w2^T,w3^T
                pl.BlockSpec((8, hidden), lambda i: (0, 0)),              # w4^T pad
                pl.BlockSpec((hidden, 4), lambda i: (0, 0)),              # biases
            ],
            out_specs=pl.BlockSpec((1, 1, bm), lambda i: (i, 0, 0)),
        ),
        compiler_params=pltpu.CompilerParams(
            dimension_semantics=("parallel",)),
        cost_estimate=cost,
    )(x, w1t, wh, w4p, bcol)

    # (num_tiles, 1, bm) lane-dense slab -> flat [B]; matches torch .squeeze(-1).
    return out.reshape(-1)[:B]


def init_params(key, input_dim, hidden_dim=16, output_dim=1):
    """Deterministic synthetic init (PyTorch-style uniform fan-in bounds).

    Weights stored as [in, out] (transpose of PyTorch's [out, in]); biases [1, out].
    """
    dims = [(input_dim, hidden_dim), (hidden_dim, hidden_dim),
            (hidden_dim, hidden_dim), (hidden_dim, output_dim)]
    params = []
    for (fan_in, fan_out) in dims:
        key, kw, kb = jax.random.split(key, 3)
        bound = 1.0 / float(np.sqrt(fan_in))
        w = jax.random.uniform(kw, (fan_in, fan_out), jnp.float32, -bound, bound)
        b = jax.random.uniform(kb, (1, fan_out), jnp.float32, -bound, bound)
        params.append((w, b))
    return params


if __name__ == "__main__":
    key = jax.random.PRNGKey(0)
    B, input_dim, hidden_dim, output_dim = 300, 24, 16, 1   # ragged B: 2 tiles, last partial

    kx, kp = jax.random.split(key)
    x = jax.random.normal(kx, (B, input_dim), jnp.float32)
    params = init_params(kp, input_dim, hidden_dim, output_dim)

    # Reference in plain JAX (eval-mode dropout = identity).
    def ref(x, params):
        (w1, b1), (w2, b2), (w3, b3), (w4, b4) = params
        h = jnp.maximum(x @ w1 + b1, 0.0)
        h = jnp.maximum(h @ w2 + b2, 0.0)
        h = jnp.maximum(h @ w3 + b3, 0.0)
        return (h @ w4 + b4).squeeze(-1)

    y = classifier_forward(x, params)                 # f32 path
    jax.block_until_ready(y)
    y_ref = ref(x, params)
    assert y.shape == (B,)
    assert jnp.allclose(y, y_ref, atol=1e-4, rtol=1e-4)

    # bf16 weight/MXU path (halves weight bytes; pass bf16 x from the producer
    # to halve the dominant x HBM read too).  Rounds x and weights before the
    # MXU (accumulation stays f32) -> looser tolerance vs. the f32 reference.
    y16 = classifier_forward(x, params, compute_dtype=jnp.bfloat16)
    jax.block_until_ready(y16)
    assert jnp.allclose(y16, y_ref, atol=5e-2, rtol=5e-2)

    # Explicit tiny-tile override still works (exercises bm kwarg path).
    y_small = classifier_forward(x, params, bm=128)
    jax.block_until_ready(y_small)
    assert jnp.allclose(y_small, y_ref, atol=1e-4, rtol=1e-4)

    print("KERNEL_OK")
</pallas_src>

<mosaic_0001>
module attributes {stable_mosaic.version = 11 : i64} {
  func.func @_mlp_kernel(%arg0: i32, %arg1: memref<256x24xf32, #tpu.memory_space<vmem>>, %arg2: memref<16x24xf32, #tpu.memory_space<vmem>>, %arg3: memref<2x16x16xf32, #tpu.memory_space<vmem>>, %arg4: memref<8x16xf32, #tpu.memory_space<vmem>>, %arg5: memref<16x4xf32, #tpu.memory_space<vmem>>, %arg6: memref<1x1x256xf32, #tpu.memory_space<vmem>>) attributes {dimension_semantics = [#tpu.dimension_semantics<parallel>], iteration_bounds = array<i64: 2>, scalar_prefetch = 0 : i64, scratch_operands = 0 : i64, tpu.core_type = #tpu.core_type<tc>, window_params = [{transform_indices = @transform_0, window_bounds = array<i64: 256, 24>}, {pipeline_mode = #tpu.pipeline_mode<synchronous>, transform_indices = @transform_1, window_bounds = array<i64: 16, 24>}, {pipeline_mode = #tpu.pipeline_mode<synchronous>, transform_indices = @transform_2, window_bounds = array<i64: 2, 16, 16>}, {pipeline_mode = #tpu.pipeline_mode<synchronous>, transform_indices = @transform_3, window_bounds = array<i64: 8, 16>}, {pipeline_mode = #tpu.pipeline_mode<synchronous>, transform_indices = @transform_4, window_bounds = array<i64: 16, 4>}, {transform_indices = @transform_5, window_bounds = array<i64: 1, 1, 256>}]} {
    %c0 = arith.constant 0 : index
    %c0_0 = arith.constant 0 : index
    %0 = vector.load %arg1[%c0, %c0_0] : memref<256x24xf32, #tpu.memory_space<vmem>>, vector<256x24xf32>
    %c0_1 = arith.constant 0 : index
    %c0_2 = arith.constant 0 : index
    %1 = vector.load %arg5[%c0_1, %c0_2] : memref<16x4xf32, #tpu.memory_space<vmem>>, vector<16x1xf32>
    %c0_3 = arith.constant 0 : index
    %c1 = arith.constant 1 : index
    %2 = vector.load %arg5[%c0_3, %c1] : memref<16x4xf32, #tpu.memory_space<vmem>>, vector<16x1xf32>
    %c0_4 = arith.constant 0 : index
    %c2 = arith.constant 2 : index
    %3 = vector.load %arg5[%c0_4, %c2] : memref<16x4xf32, #tpu.memory_space<vmem>>, vector<16x1xf32>
    %c0_5 = arith.constant 0 : index
    %c3 = arith.constant 3 : index
    %4 = vector.load %arg5[%c0_5, %c3] : memref<16x4xf32, #tpu.memory_space<vmem>>, vector<1x1xf32>
    %c0_6 = arith.constant 0 : index
    %c0_7 = arith.constant 0 : index
    %5 = vector.load %arg2[%c0_6, %c0_7] : memref<16x24xf32, #tpu.memory_space<vmem>>, vector<16x24xf32>
    %cst = arith.constant dense<0.000000e+00> : vector<16x256xf32>
    %6 = tpu.matmul %5, %0, %cst {dimension_numbers = #tpu.dot_dimension_numbers<[1], [1], [0], [0], [0, 0, 1, 0], [], []>} : vector<16x24xf32>, vector<256x24xf32>, vector<16x256xf32> -> vector<16x256xf32>
    %7 = vector.broadcast %1 : vector<16x1xf32> to vector<16x256xf32>
    %8 = arith.addf %6, %7 : vector<16x256xf32>
    %cst_8 = arith.constant 0.000000e+00 : f32
    %9 = vector.broadcast %cst_8 : f32 to vector<16x256xf32>
    %10 = arith.maximumf %8, %9 : vector<16x256xf32>
    %c0_9 = arith.constant 0 : index
    %c0_10 = arith.constant 0 : index
    %c0_11 = arith.constant 0 : index
    %11 = vector.load %arg3[%c0_9, %c0_10, %c0_11] : memref<2x16x16xf32, #tpu.memory_space<vmem>>, vector<1x16x16xf32>
    %12 = vector.shape_cast %11 : vector<1x16x16xf32> to vector<16x16xf32>
    %cst_12 = arith.constant dense<0.000000e+00> : vector<16x256xf32>
    %13 = tpu.matmul %12, %10, %cst_12 {dimension_numbers = #tpu.dot_dimension_numbers<[1], [0], [0], [1], [0, 0, 1, 1], [], []>} : vector<16x16xf32>, vector<16x256xf32>, vector<16x256xf32> -> vector<16x256xf32>
    %14 = vector.broadcast %2 : vector<16x1xf32> to vector<16x256xf32>
    %15 = arith.addf %13, %14 : vector<16x256xf32>
    %cst_13 = arith.constant 0.000000e+00 : f32
    %16 = vector.broadcast %cst_13 : f32 to vector<16x256xf32>
    %17 = arith.maximumf %15, %16 : vector<16x256xf32>
    %c1_14 = arith.constant 1 : index
    %c0_15 = arith.constant 0 : index
    %c0_16 = arith.constant 0 : index
    %18 = vector.load %arg3[%c1_14, %c0_15, %c0_16] : memref<2x16x16xf32, #tpu.memory_space<vmem>>, vector<1x16x16xf32>
    %19 = vector.shape_cast %18 : vector<1x16x16xf32> to vector<16x16xf32>
    %cst_17 = arith.constant dense<0.000000e+00> : vector<16x256xf32>
    %20 = tpu.matmul %19, %17, %cst_17 {dimension_numbers = #tpu.dot_dimension_numbers<[1], [0], [0], [1], [0, 0, 1, 1], [], []>} : vector<16x16xf32>, vector<16x256xf32>, vector<16x256xf32> -> vector<16x256xf32>
    %21 = vector.broadcast %3 : vector<16x1xf32> to vector<16x256xf32>
    %22 = arith.addf %20, %21 : vector<16x256xf32>
    %cst_18 = arith.constant 0.000000e+00 : f32
    %23 = vector.broadcast %cst_18 : f32 to vector<16x256xf32>
    %24 = arith.maximumf %22, %23 : vector<16x256xf32>
    %c0_19 = arith.constant 0 : index
    %c0_20 = arith.constant 0 : index
    %25 = vector.load %arg4[%c0_19, %c0_20] : memref<8x16xf32, #tpu.memory_space<vmem>>, vector<8x16xf32>
    %cst_21 = arith.constant dense<0.000000e+00> : vector<8x256xf32>
    %26 = tpu.matmul %25, %24, %cst_21 {dimension_numbers = #tpu.dot_dimension_numbers<[1], [0], [0], [1], [0, 0, 1, 1], [], []>} : vector<8x16xf32>, vector<16x256xf32>, vector<8x256xf32> -> vector<8x256xf32>
    %27 = vector.extract_strided_slice %26 {offsets = [0, 0], sizes = [1, 256], strides = [1, 1]} : vector<8x256xf32> to vector<1x256xf32>
    %28 = vector.broadcast %4 : vector<1x1xf32> to vector<1x256xf32>
    %29 = arith.addf %27, %28 : vector<1x256xf32>
    %30 = vector.shape_cast %29 : vector<1x256xf32> to vector<1x1x256xf32>
    %c0_22 = arith.constant 0 : index
    %c0_23 = arith.constant 0 : index
    %c0_24 = arith.constant 0 : index
    %31 = vector.load %arg6[%c0_22, %c0_23, %c0_24] : memref<1x1x256xf32, #tpu.memory_space<vmem>>, vector<1x1x256xf32>
    tpu.vector_store %arg6[%c0_22, %c0_23, %c0_24], %30 {strides = array<i32>} : memref<1x1x256xf32, #tpu.memory_space<vmem>>, vector<1x1x256xf32>,
    return
  }
  func.func @transform_0(%arg0: i32) -> (i32, i32) {
    %c0_i32 = arith.constant 0 : i32
    %c0_i32_0 = arith.constant 0 : i32
    return %arg0, %c0_i32 : i32, i32
  }
  func.func @transform_1(%arg0: i32) -> (i32, i32) {
    %c0_i32 = arith.constant 0 : i32
    %c0_i32_0 = arith.constant 0 : i32
    %c0_i32_1 = arith.constant 0 : i32
    return %c0_i32, %c0_i32_0 : i32, i32
  }
  func.func @transform_2(%arg0: i32) -> (i32, i32, i32) {
    %c0_i32 = arith.constant 0 : i32
    %c0_i32_0 = arith.constant 0 : i32
    %c0_i32_1 = arith.constant 0 : i32
    %c0_i32_2 = arith.constant 0 : i32
    return %c0_i32, %c0_i32_0, %c0_i32_1 : i32, i32, i32
  }
  func.func @transform_3(%arg0: i32) -> (i32, i32) {
    %c0_i32 = arith.constant 0 : i32
    %c0_i32_0 = arith.constant 0 : i32
    %c0_i32_1 = arith.constant 0 : i32
    return %c0_i32, %c0_i32_0 : i32, i32
  }
  func.func @transform_4(%arg0: i32) -> (i32, i32) {
    %c0_i32 = arith.constant 0 : i32
    %c0_i32_0 = arith.constant 0 : i32
    %c0_i32_1 = arith.constant 0 : i32
    return %c0_i32, %c0_i32_0 : i32, i32
  }
  func.func @transform_5(%arg0: i32) -> (i32, i32, i32) {
    %c0_i32 = arith.constant 0 : i32
    %c0_i32_0 = arith.constant 0 : i32
    %c0_i32_1 = arith.constant 0 : i32
    return %arg0, %c0_i32, %c0_i32_0 : i32, i32, i32
  }
}

</mosaic_0001>

<llo_original>
// kernel: tpu_custom_call.1
$region0: #{tpu_custom_call.1}
  #allocation0 [shape = 'u32[]', space=smem, size = 0x4, offset = 0x4, fixed_abs, tag = 'smem constant byte address 0x4 - core index']
  #allocation1 [shape = 'u32[144,128]{1,0:T(1,128)}', space=vmem, size = 0x12000, scoped, tag = 'internal scratch']
  %s0 = inlined_call_operand.vmem [shape: f32[300,24], index: 0, kind: input, shape index: {}]
  %s1 = inlined_call_operand.vmem [shape: f32[16,24], index: 1, kind: input, shape index: {}]
  %s2 = inlined_call_operand.vmem [shape: f32[2,16,16], index: 2, kind: input, shape index: {}]
  %s3 = inlined_call_operand.vmem [shape: f32[8,16], index: 3, kind: input, shape index: {}]
  %s4 = inlined_call_operand.vmem [shape: f32[16,4], index: 4, kind: input, shape index: {}]
  %s5 = inlined_call_operand.hbm [shape: f32[2,1,256], index: 5, kind: output, shape index: {}]
  %s6 = sld [smem:[#allocation0]]
  $region53: #{tpu_custom_call.1} parent=0
    _
  %s8 = ssub.s32 1, %s6
  %s9 = scalar_select 0, %s8, %s6
  $region1: #{tpu_custom_call.1} parent=0
    #allocation2 [shape = 'u8[2048]{0}', space=vmem, size = 0x800, scoped, tag = 'output window, operand 0']
    #allocation3 [shape = 's32[2]{0}', space=sflag, size = 0x8, scoped, tag = 'scoped memory for tpu_custom_call.1']
    %10 = vsyncpa [#allocation3], 0
    %s11 = scalar_lea.sflag [#allocation3], 1
    %12 = vsyncpa %s11, 0
    loop: start=0, step=1, limit=4
    $region2: #{tpu_custom_call.1} parent=1 // loop_pre_header
      _
    $region3: #{tpu_custom_call.1} parent=1 // loop_header
      %s14 = sphi 0, %s18
      %p15 = scmp.ge.s32.totalorder %s14, 4
      %s24 = sphi 0, %s26
      %s27 = sphi 0, %s24
      %s28 = sphi 0, %s27
      %s44 = sphi 0, %s28
      %s48 = sphi 0, %s48
      %s50 = sphi 0, %s48
      %s51 = sphi 0, %s50
      %s65 = sphi 0, %s51
      %s69 = sphi 0, %s69
      %s71 = sphi 0, %s69
      %s72 = sphi 0, %s71
      %s86 = sphi 0, %s72
      %s90 = sphi 0, %s90
      %s92 = sphi 0, %s90
      %s93 = sphi 0, %s92
      %s107 = sphi 0, %s93
      %s111 = sphi 0, %s111
      %s113 = sphi 0, %s111
      %s114 = sphi 0, %s113
      %s128 = sphi 0, %s114
      %s134 = sphi 0, %s136
      %s137 = sphi 0, %s134
      %s138 = sphi 0, %s137
      %s154 = sphi 0, %s138
    $region4: #{tpu_custom_call.1} parent=1 // loop_header_branch
      %17 = sbr.rel (%p15) target = $region8
    $region5: #{tpu_custom_call.1} parent=1 // loop_body
      %s19 = ssub.s32 %s14, 1
      %s20 = ssub.s32 %s14, 2
      %s21 = sadd.s32 %s14, 1
      %s22 = ssub.s32 %s14, %s21
      %p23 = scmp.eq.s32.totalorder %s22, 0
      %s25 = sadd.s32 %s24, 1
      %s26 = scalar_select %p23, %s24, %s25
      %p29 = pneg %p23
      %p30 = scmp.eq.s32.totalorder %s14, 1
      %p31 = por %p29, %p30
      %p32 = scmp.ne.s32.totalorder %s24, %s27
      %p33 = scmp.eq.s32.totalorder %s14, 0
      %p34 = por %p32, %p33
      %p35 = scmp.ne.s32.totalorder %s24, %s27
      %p36 = scmp.eq.s32.totalorder %s19, 1
      %p37 = por %p35, %p36
      %p38 = scmp.ne.s32.totalorder %s27, %s28
      %p39 = scmp.eq.s32.totalorder %s19, 0
      %p40 = por %p38, %p39
      %p41 = scmp.ne.s32.totalorder %s27, %s28
      %p42 = scmp.eq.s32.totalorder %s20, 1
      %p43 = por %p41, %p42
      %p45 = scmp.ne.s32.totalorder %s28, %s44
      %p46 = scmp.eq.s32.totalorder %s20, 0
      %p47 = por %p45, %p46
      %s49 = sadd.s32 %s48, 1
      %p52 = scmp.eq.s32.totalorder %s14, 1
      %p53 = scmp.ne.s32.totalorder %s48, %s50
      %p54 = scmp.eq.s32.totalorder %s14, 0
      %p55 = por %p53, %p54
      %p56 = scmp.ne.s32.totalorder %s48, %s50
      %p57 = scmp.eq.s32.totalorder %s19, 1
      %p58 = por %p56, %p57
      %p59 = scmp.ne.s32.totalorder %s50, %s51
      %p60 = scmp.eq.s32.totalorder %s19, 0
      %p61 = por %p59, %p60
      %p62 = scmp.ne.s32.totalorder %s50, %s51
      %p63 = scmp.eq.s32.totalorder %s20, 1
      %p64 = por %p62, %p63
      %p66 = scmp.ne.s32.totalorder %s51, %s65
      %p67 = scmp.eq.s32.totalorder %s20, 0
      %p68 = por %p66, %p67
      %s70 = sadd.s32 %s69, 1
      %p73 = scmp.eq.s32.totalorder %s14, 1
      %p74 = scmp.ne.s32.totalorder %s69, %s71
      %p75 = scmp.eq.s32.totalorder %s14, 0
      %p76 = por %p74, %p75
      %p77 = scmp.ne.s32.totalorder %s69, %s71
      %p78 = scmp.eq.s32.totalorder %s19, 1
      %p79 = por %p77, %p78
      %p80 = scmp.ne.s32.totalorder %s71, %s72
      %p81 = scmp.eq.s32.totalorder %s19, 0
      %p82 = por %p80, %p81
      %p83 = scmp.ne.s32.totalorder %s71, %s72
      %p84 = scmp.eq.s32.totalorder %s20, 1
      %p85 = por %p83, %p84
      %p87 = scmp.ne.s32.totalorder %s72, %s86
      %p88 = scmp.eq.s32.totalorder %s20, 0
      %p89 = por %p87, %p88
      %s91 = sadd.s32 %s90, 1
      %p94 = scmp.eq.s32.totalorder %s14, 1
      %p95 = scmp.ne.s32.totalorder %s90, %s92
      %p96 = scmp.eq.s32.totalorder %s14, 0
      %p97 = por %p95, %p96
      %p98 = scmp.ne.s32.totalorder %s90, %s92
      %p99 = scmp.eq.s32.totalorder %s19, 1
      %p100 = por %p98, %p99
      %p101 = scmp.ne.s32.totalorder %s92, %s93
      %p102 = scmp.eq.s32.totalorder %s19, 0
      %p103 = por %p101, %p102
      %p104 = scmp.ne.s32.totalorder %s92, %s93
      %p105 = scmp.eq.s32.totalorder %s20, 1
      %p106 = por %p104, %p105
      %p108 = scmp.ne.s32.totalorder %s93, %s107
      %p109 = scmp.eq.s32.totalorder %s20, 0
      %p110 = por %p108, %p109
      %s112 = sadd.s32 %s111, 1
      %p115 = scmp.eq.s32.totalorder %s14, 1
      %p116 = scmp.ne.s32.totalorder %s111, %s113
      %p117 = scmp.eq.s32.totalorder %s14, 0
      %p118 = por %p116, %p117
      %p119 = scmp.ne.s32.totalorder %s111, %s113
      %p120 = scmp.eq.s32.totalorder %s19, 1
      %p121 = por %p119, %p120
      %p122 = scmp.ne.s32.totalorder %s113, %s114
      %p123 = scmp.eq.s32.totalorder %s19, 0
      %p124 = por %p122, %p123
      %p125 = scmp.ne.s32.totalorder %s113, %s114
      %p126 = scmp.eq.s32.totalorder %s20, 1
      %p127 = por %p125, %p126
      %p129 = scmp.ne.s32.totalorder %s114, %s128
      %p130 = scmp.eq.s32.totalorder %s20, 0
      %p131 = por %p129, %p130
      %s132 = ssub.s32 %s14, %s21
      %p133 = scmp.eq.s32.totalorder %s132, 0
      %s135 = sadd.s32 %s134, 1
      %s136 = scalar_select %p133, %s134, %s135
      %p139 = pneg %p133
      %p140 = scmp.eq.s32.totalorder %s14, 1
      %p141 = por %p139, %p140
      %p142 = scmp.ne.s32.totalorder %s134, %s137
      %p143 = scmp.eq.s32.totalorder %s14, 0
      %p144 = por %p142, %p143
      %p145 = scmp.ne.s32.totalorder %s134, %s137
      %p146 = scmp.eq.s32.totalorder %s19, 1
      %p147 = por %p145, %p146
      %p148 = scmp.ne.s32.totalorder %s137, %s138
      %p149 = scmp.eq.s32.totalorder %s19, 0
      %p150 = por %p148, %p149
      %p151 = scmp.ne.s32.totalorder %s137, %s138
      %p152 = scmp.eq.s32.totalorder %s20, 1
      %p153 = por %p151, %p152
      %p155 = scmp.ne.s32.totalorder %s138, %s154
      %p156 = scmp.eq.s32.totalorder %s20, 0
      %p157 = por %p155, %p156
      %p158 = scmp.le.s32.totalorder 1, %s14
      %p159 = scmp.lt.s32.totalorder %s14, 3
      %p160 = pnand %p158, %p159
      %p161 = pneg %p160
      // Predicated region
      $region9: #{tpu_custom_call.1} parent=5 // pred_check
        _
      $region10: #{tpu_custom_call.1} parent=5 // pred_check_branch
        %163 = sbr.rel (%p160) target = $region12
      $region11: #{tpu_custom_call.1} parent=5 // pred_region
        %s164 = ssub.s32 %s14, 1
        // Predicated region
        $region13: #{tpu_custom_call.1} parent=11 // pred_check
          %p165 = pneg %p61
        $region14: #{tpu_custom_call.1} parent=11 // pred_check_branch
          %167 = sbr.rel (%p165) target = $region16
        $region15: #{tpu_custom_call.1} parent=11 // pred_region
          _
        $region16: #{tpu_custom_call.1} parent=11 // pred_fallthru
          _
        // Predicated region
        $region17: #{tpu_custom_call.1} parent=11 // pred_check
          %p168 = pneg %p82
        $region18: #{tpu_custom_call.1} parent=11 // pred_check_branch
          %170 = sbr.rel (%p168) target = $region20
        $region19: #{tpu_custom_call.1} parent=11 // pred_region
          _
        $region20: #{tpu_custom_call.1} parent=11 // pred_fallthru
          _
        // Predicated region
        $region21: #{tpu_custom_call.1} parent=11 // pred_check
          %p171 = pneg %p103
        $region22: #{tpu_custom_call.1} parent=11 // pred_check_branch
          %173 = sbr.rel (%p171) target = $region24
        $region23: #{tpu_custom_call.1} parent=11 // pred_region
          _
        $region24: #{tpu_custom_call.1} parent=11 // pred_fallthru
          _
        // Predicated region
        $region25: #{tpu_custom_call.1} parent=11 // pred_check
          %p174 = pneg %p124
        $region26: #{tpu_custom_call.1} parent=11 // pred_check_branch
          %176 = sbr.rel (%p174) target = $region28
        $region27: #{tpu_custom_call.1} parent=11 // pred_region
          _
        $region28: #{tpu_custom_call.1} parent=11 // pred_fallthru
          _
      $region12: #{tpu_custom_call.1} parent=5 // pred_fallthru
        _
      %p177 = scmp.lt.s32.totalorder %s14, 2
      // Predicated region
      $region29: #{tpu_custom_call.1} parent=5 // pred_check
        %p178 = pneg %p177
      $region30: #{tpu_custom_call.1} parent=5 // pred_check_branch
        %180 = sbr.rel (%p178) target = $region32
      $region31: #{tpu_custom_call.1} parent=5 // pred_region
        // Predicated region
        $region33: #{tpu_custom_call.1} parent=31 // pred_check
          %p181 = pneg %p34
        $region34: #{tpu_custom_call.1} parent=31 // pred_check_branch
          %183 = sbr.rel (%p181) target = $region36
        $region35: #{tpu_custom_call.1} parent=31 // pred_region
          %s184 = smul.u32 32, %s14
          %s185 = ssub.s32 38, %s184
          %p186 = scmp.lt.s32.totalorder %s185, 32
          %s187 = scalar_select %p186, %s185, 32
          %s188 = smul.u32 128, %s187
          %p189 = scmp.lt.s32.totalorder %s184, 37
          %s190 = scalar_select %p189, %s184, 37
          %s191 = smul.addr %s190, 8
          %s192 = scalar_lea.vmem %s0, %s191
          %s193 = smul.u32 32, %s14
          %s194 = ssub.s32 38, %s193
          %p195 = scmp.lt.s32.totalorder %s194, 32
          %s196 = scalar_select %p195, %s194, 32
          %s197 = smul.u32 128, %s196
        $region36: #{tpu_custom_call.1} parent=31 // pred_fallthru
          _
      $region32: #{tpu_custom_call.1} parent=5 // pred_fallthru
        _
      %p198 = scmp.le.s32.totalorder 1, %s14
      %p199 = scmp.lt.s32.totalorder %s14, 3
      %p200 = pnand %p198, %p199
      %p201 = pneg %p200
      // Predicated region
      $region37: #{tpu_custom_call.1} parent=5 // pred_check
        _
      $region38: #{tpu_custom_call.1} parent=5 // pred_check_branch
        %203 = sbr.rel (%p200) target = $region40
      $region39: #{tpu_custom_call.1} parent=5 // pred_region
        %s204 = ssub.s32 %s14, 1
        %s205 = smul.u32 32, %s19
        %s206 = ssub.s32 38, %s205
        %p207 = scmp.lt.s32.totalorder %s206, 32
        %s208 = scalar_select %p207, %s206, 32
        %s209 = smul.u32 128, %s208
        %p210 = scmp.lt.s32.totalorder %s205, 37
        %s211 = scalar_select %p210, %s205, 37
        %s212 = smul.addr %s211, 8
        %s213 = scalar_lea.vmem %s0, %s212
        %p214 = pneg %p40
        %p215 = pneg %p37
        %p216 = pneg %p61
        %p217 = pneg %p58
        %p218 = pneg %p82
        %p219 = pneg %p79
        %p220 = pneg %p103
        %p221 = pneg %p100
        %p222 = pneg %p124
        %p223 = pneg %p121
        %p224 = pneg %p150
        %p225 = pneg %p147
        %s226 = sand.u32 %s137, 1
        %s227 = scalar_lea.sflag [#allocation3], %s226
        %s228 = sand.u32 %s137, 1
        %s229 = smul.addr %s228, 2
        %s230 = scalar_lea.vmem [#allocation2], %s229
        %s231 = smul.u32 32, %s19
        %s232 = ssub.s32 38, %s231
        %p233 = scmp.lt.s32.totalorder %s232, 32
        %s234 = scalar_select %p233, %s232, 32
        %s235 = smul.u32 128, %s234
        %p236 = scmp.lt.s32.totalorder %s231, 37
        %s237 = scalar_select %p236, %s231, 37
        %s238 = smul.addr %s237, 8
        %s239 = scalar_lea.vmem %s0, %s238
        %s240 = smul.u32 32, %s19
        %s241 = ssub.s32 38, %s240
        %p242 = scmp.lt.s32.totalorder %s241, 32
        %s243 = scalar_select %p242, %s241, 32
        %s244 = smul.u32 128, %s243
        %v245 = vld [vmem:[%s239] sm:$0xff]
        %v246 = vld [vmem:[%s239 + $0x8] sm:$0xff]
        %v247 = vld [vmem:[%s239 + $0x10] sm:$0xff]
        %v248 = vld [vmem:[%s239 + $0x18] sm:$0xff]
        %v249 = vld [vmem:[%s239 + $0x20] sm:$0xff]
        %v250 = vld [vmem:[%s239 + $0x28] sm:$0xff]
        %v251 = vld [vmem:[%s239 + $0x30] sm:$0xff]
        %v252 = vld [vmem:[%s239 + $0x38] sm:$0xff]
        %v253 = vld [vmem:[%s239 + $0x40] sm:$0xff]
        %v254 = vld [vmem:[%s239 + $0x48] sm:$0xff]
        %v255 = vld [vmem:[%s239 + $0x50] sm:$0xff]
        %v256 = vld [vmem:[%s239 + $0x58] sm:$0xff]
        %v257 = vld [vmem:[%s239 + $0x60] sm:$0xff]
        %v258 = vld [vmem:[%s239 + $0x68] sm:$0xff]
        %v259 = vld [vmem:[%s239 + $0x70] sm:$0xff]
        %v260 = vld [vmem:[%s239 + $0x78] sm:$0xff]
        %v261 = vld [vmem:[%s239 + $0x80] sm:$0xff]
        %v262 = vld [vmem:[%s239 + $0x88] sm:$0xff]
        %v263 = vld [vmem:[%s239 + $0x90] sm:$0xff]
        %v264 = vld [vmem:[%s239 + $0x98] sm:$0xff]
        %v265 = vld [vmem:[%s239 + $0xa0] sm:$0xff]
        %v266 = vld [vmem:[%s239 + $0xa8] sm:$0xff]
        %v267 = vld [vmem:[%s239 + $0xb0] sm:$0xff]
        %v268 = vld [vmem:[%s239 + $0xb8] sm:$0xff]
        %v269 = vld [vmem:[%s239 + $0xc0] sm:$0xff]
        %v270 = vld [vmem:[%s239 + $0xc8] sm:$0xff]
        %v271 = vld [vmem:[%s239 + $0xd0] sm:$0xff]
        %v272 = vld [vmem:[%s239 + $0xd8] sm:$0xff]
        %v273 = vld [vmem:[%s239 + $0xe0] sm:$0xff]
        %v274 = vld [vmem:[%s239 + $0xe8] sm:$0xff]
        %v275 = vld [vmem:[%s239 + $0xf0] sm:$0xff]
        %v276 = vld [vmem:[%s239 + $0xf8] sm:$0xff]
        %v277 = vld [vmem:[%s4] sm:$0xff]
        %v278 = vld [vmem:[%s4 + $0x8] sm:$0xff]
        %v279 = vld [vmem:[%s4] sm:$0x1]
        %v280 = vld [vmem:[%s1] sm:$0xff]
        %v281 = vld [vmem:[%s1 + $0x8] sm:$0xff]
        %283 = vset.pattern.permute.xlu0 0
        %284 = vperm.xlu0 %283, %v277
        %v285 = vpop.permute.xlu0 %284
        %288 = vset.pattern.permute.xlu0 0
        %289 = vperm.xlu0 %288, %v278
        %v290 = vpop.permute.xlu0 %289
        %vm292 = vcmask 195584
        %v294 = vsel %vm292, %v280, 0
        %v297 = vsel %vm292, %v281, 0
        %v300 = vsel %vm292, %v245, 0
        %v303 = vsel %vm292, %v246, 0
        %v306 = vsel %vm292, %v247, 0
        %v309 = vsel %vm292, %v248, 0
        %v312 = vsel %vm292, %v249, 0
        %v315 = vsel %vm292, %v250, 0
        %v318 = vsel %vm292, %v251, 0
        %v321 = vsel %vm292, %v252, 0
        %v324 = vsel %vm292, %v253, 0
        %v327 = vsel %vm292, %v254, 0
        %v330 = vsel %vm292, %v255, 0
        %v333 = vsel %vm292, %v256, 0
        %v336 = vsel %vm292, %v257, 0
        %v339 = vsel %vm292, %v258, 0
        %v342 = vsel %vm292, %v259, 0
        %v345 = vsel %vm292, %v260, 0
        %v348 = vsel %vm292, %v261, 0
        %v351 = vsel %vm292, %v262, 0
        %v354 = vsel %vm292, %v263, 0
        %v357 = vsel %vm292, %v264, 0
        %v360 = vsel %vm292, %v265, 0
        %v363 = vsel %vm292, %v266, 0
        %v366 = vsel %vm292, %v267, 0
        %v369 = vsel %vm292, %v268, 0
        %v372 = vsel %vm292, %v269, 0
        %v375 = vsel %vm292, %v270, 0
        %v378 = vsel %vm292, %v271, 0
        %v381 = vsel %vm292, %v272, 0
        %v384 = vsel %vm292, %v273, 0
        %v387 = vsel %vm292, %v274, 0
        %v390 = vsel %vm292, %v275, 0
        %v393 = vsel %vm292, %v276, 0
        %395 = vmatprep.subr.mxu0 0.0
        %396 = vmatpush1.xpose.msra.mxu0 %v300
        %397 = vmatprep.subr.mxu0 0.0
        %398 = vmatpush1.xpose.msra.mxu0 %v303
        %399 = vmatprep.subr.mxu0 0.0
        %400 = vmatpush1.xpose.msra.mxu0 %v306
        %401 = vmatprep.subr.mxu0 0.0
        %402 = vmatpush1.xpose.msra.mxu0 %v309
        %403 = vmatprep.subr.mxu0 0.0
        %404 = vmatpush1.xpose.msra.mxu0 %v312
        %405 = vmatprep.subr.mxu0 0.0
        %406 = vmatpush1.xpose.msra.mxu0 %v315
        %407 = vmatprep.subr.mxu0 0.0
        %408 = vmatpush1.xpose.msra.mxu0 %v318
        %409 = vmatprep.subr.mxu0 0.0
        %410 = vmatpush1.xpose.msra.mxu0 %v321
        %411 = vmatprep.subr.mxu0 0.0
        %412 = vmatpush1.xpose.msra.mxu0 %v324
        %413 = vmatprep.subr.mxu0 0.0
        %414 = vmatpush1.xpose.msra.mxu0 %v327
        %415 = vmatprep.subr.mxu0 0.0
        %416 = vmatpush1.xpose.msra.mxu0 %v330
        %417 = vmatprep.subr.mxu0 0.0
        %418 = vmatpush1.xpose.msra.mxu0 %v333
        %419 = vmatprep.subr.mxu0 0.0
        %420 = vmatpush1.xpose.msra.mxu0 %v336
        %421 = vmatprep.subr.mxu0 0.0
        %422 = vmatpush1.xpose.msra.mxu0 %v339
        %423 = vmatprep.subr.mxu0 0.0
        %424 = vmatpush1.xpose.msra.mxu0 %v342
        %425 = vmatprep.subr.mxu0 0.0
        %426 = vmatpush1.xpose.msra.mxu0 %v345
        %427 = vmatprep.subr.mxu0 0.0
        %428 = vmatpush1.xpose.msra.mxu0 %v348
        %429 = vmatprep.subr.mxu0 0.0
        %430 = vmatpush1.xpose.msra.mxu0 %v351
        %431 = vmatprep.subr.mxu0 0.0
        %432 = vmatpush1.xpose.msra.mxu0 %v354
        %433 = vmatprep.subr.mxu0 0.0
        %434 = vmatpush1.xpose.msra.mxu0 %v357
        %435 = vmatprep.subr.mxu0 0.0
        %436 = vmatpush1.xpose.msra.mxu0 %v360
        %437 = vmatprep.subr.mxu0 0.0
        %438 = vmatpush1.xpose.msra.mxu0 %v363
        %439 = vmatprep.subr.mxu0 0.0
        %440 = vmatpush1.xpose.msra.mxu0 %v366
        %441 = vmatprep.subr.mxu0 0.0
        %442 = vmatpush1.xpose.msra.mxu0 %v369
        %443 = vmatprep.subr.mxu0 0.0
        %444 = vmatpush1.xpose.msra.mxu0 %v372
        %445 = vmatprep.subr.mxu0 0.0
        %446 = vmatpush1.xpose.msra.mxu0 %v375
        %447 = vmatprep.subr.mxu0 0.0
        %448 = vmatpush1.xpose.msra.mxu0 %v378
        %449 = vmatprep.subr.mxu0 0.0
        %450 = vmatpush1.xpose.msra.mxu0 %v381
        %451 = vmatprep.subr.mxu0 0.0
        %452 = vmatpush1.xpose.msra.mxu0 %v384
        %453 = vmatprep.subr.mxu0 0.0
        %454 = vmatpush1.xpose.msra.mxu0 %v387
        %455 = vmatprep.subr.mxu0 0.0
        %456 = vmatpush1.xpose.msra.mxu0 %v390
        %457 = vmatprep.subr.mxu0 0.0
        %458 = vmatpush1.xpose.msra.mxu0 %v393
        %459 = vmatprep.mubr.f32.mxu0 0.0
        %460 = vmatmul.mubr.f32.gmra.mrb[0].mxu0 %v294
        %v461 = vpop.f32.mrb[0].mxu0
        %v462 = vadd.f32 %v285, %v461
        %v463 = vpop.f32.mrb[0].mxu0
        %v464 = vadd.f32 %v285, %v463
        %465 = vmatprep.mubr.f32.mxu0 0.0
        %466 = vmatmul.mubr.f32.gmra.mrb[0].mxu0 %v297
        %v467 = vpop.f32.mrb[0].mxu0
        %v468 = vadd.f32 %v290, %v467
        %v469 = vpop.f32.mrb[0].mxu0
        %v470 = vadd.f32 %v290, %v469
        %471 = vdwg.mxu0
        %v472 = vmax.f32 %v462, 0.0
        %v473 = vmax.f32 %v464, 0.0
        %v474 = vmax.f32 %v468, 0.0
        %v475 = vmax.f32 %v470, 0.0
        %v476 = vld [vmem:[%s2] sm:$0xff]
        %v477 = vld [vmem:[%s2 + $0x8] sm:$0xff]
        %478 = vset.pattern.permute.xlu0 1
        %479 = vperm.xlu0 %478, %v277
        %v480 = vpop.permute.xlu0 %479
        %482 = vset.pattern.permute.xlu0 1
        %483 = vperm.xlu0 %482, %v278
        %v484 = vpop.permute.xlu0 %483
        %vm486 = vcmask 130048
        %v488 = vsel %vm486, %v476, 0
        %v491 = vsel %vm486, %v477, 0
        %493 = vmatprep.subr.mxu0 %v473
        %494 = vmatpush1.msra.mxu0 %v472
        %495 = vmatprep.subr.mxu0 %v475
        %496 = vmatpush1.msra.mxu0 %v474
        %497 = vmatprep.subr.mxu0 0.0
        %498 = vmatpush1.msra.mxu0 0.0
        %499 = vmatprep.subr.mxu0 0.0
        %500 = vmatpush1.msra.mxu0 0.0
        %501 = vmatprep.subr.mxu0 0.0
        %502 = vmatpush1.msra.mxu0 0.0
        %503 = vmatprep.subr.mxu0 0.0
        %504 = vmatpush1.msra.mxu0 0.0
        %505 = vmatprep.subr.mxu0 0.0
        %506 = vmatpush1.msra.mxu0 0.0
        %507 = vmatprep.subr.mxu0 0.0
        %508 = vmatpush1.msra.mxu0 0.0
        %509 = vmatprep.subr.mxu0 0.0
        %510 = vmatpush1.msra.mxu0 0.0
        %511 = vmatprep.subr.mxu0 0.0
        %512 = vmatpush1.msra.mxu0 0.0
        %513 = vmatprep.subr.mxu0 0.0
        %514 = vmatpush1.msra.mxu0 0.0
        %515 = vmatprep.subr.mxu0 0.0
        %516 = vmatpush1.msra.mxu0 0.0
        %517 = vmatprep.subr.mxu0 0.0
        %518 = vmatpush1.msra.mxu0 0.0
        %519 = vmatprep.subr.mxu0 0.0
        %520 = vmatpush1.msra.mxu0 0.0
        %521 = vmatprep.subr.mxu0 0.0
        %522 = vmatpush1.msra.mxu0 0.0
        %523 = vmatprep.subr.mxu0 0.0
        %524 = vmatpush1.msra.mxu0 0.0
        %525 = vmatprep.subr.mxu0 0.0
        %526 = vmatpush1.msra.mxu0 0.0
        %527 = vmatprep.subr.mxu0 0.0
        %528 = vmatpush1.msra.mxu0 0.0
        %529 = vmatprep.subr.mxu0 0.0
        %530 = vmatpush1.msra.mxu0 0.0
        %531 = vmatprep.subr.mxu0 0.0
        %532 = vmatpush1.msra.mxu0 0.0
        %533 = vmatprep.subr.mxu0 0.0
        %534 = vmatpush1.msra.mxu0 0.0
        %535 = vmatprep.subr.mxu0 0.0
        %536 = vmatpush1.msra.mxu0 0.0
        %537 = vmatprep.subr.mxu0 0.0
        %538 = vmatpush1.msra.mxu0 0.0
        %539 = vmatprep.subr.mxu0 0.0
        %540 = vmatpush1.msra.mxu0 0.0
        %541 = vmatprep.subr.mxu0 0.0
        %542 = vmatpush1.msra.mxu0 0.0
        %543 = vmatprep.subr.mxu0 0.0
        %544 = vmatpush1.msra.mxu0 0.0
        %545 = vmatprep.subr.mxu0 0.0
        %546 = vmatpush1.msra.mxu0 0.0
        %547 = vmatprep.subr.mxu0 0.0
        %548 = vmatpush1.msra.mxu0 0.0
        %549 = vmatprep.subr.mxu0 0.0
        %550 = vmatpush1.msra.mxu0 0.0
        %551 = vmatprep.subr.mxu0 0.0
        %552 = vmatpush1.msra.mxu0 0.0
        %553 = vmatprep.subr.mxu0 0.0
        %554 = vmatpush1.msra.mxu0 0.0
        %555 = vmatprep.subr.mxu0 0.0
        %556 = vmatpush1.msra.mxu0 0.0
        %557 = vmatprep.mubr.f32.mxu0 0.0
        %558 = vmatmul.mubr.f32.gmra.mrb[0].mxu0 %v488
        %v559 = vpop.f32.mrb[0].mxu0
        %v560 = vadd.f32 %v480, %v559
        %v561 = vpop.f32.mrb[0].mxu0
        %v562 = vadd.f32 %v480, %v561
        %563 = vmatprep.mubr.f32.mxu0 0.0
        %564 = vmatmul.mubr.f32.gmra.mrb[0].mxu0 %v491
        %v565 = vpop.f32.mrb[0].mxu0
        %v566 = vadd.f32 %v484, %v565
        %v567 = vpop.f32.mrb[0].mxu0
        %v568 = vadd.f32 %v484, %v567
        %569 = vdwg.mxu0
        %v570 = vmax.f32 %v560, 0.0
        %v571 = vmax.f32 %v562, 0.0
        %v572 = vmax.f32 %v566, 0.0
        %v573 = vmax.f32 %v568, 0.0
        %s574 = scalar_lea.vmem %s2, 16
        %v575 = vld [vmem:[%s574] sm:$0xff]
        %v576 = vld [vmem:[%s574 + $0x8] sm:$0xff]
        %577 = vset.pattern.permute.xlu0 2
        %578 = vperm.xlu0 %577, %v277
        %v579 = vpop.permute.xlu0 %578
        %581 = vset.pattern.permute.xlu0 2
        %582 = vperm.xlu0 %581, %v278
        %v583 = vpop.permute.xlu0 %582
        %v586 = vsel %vm486, %v575, 0
        %v589 = vsel %vm486, %v576, 0
        %591 = vmatprep.subr.mxu0 %v571
        %592 = vmatpush1.msra.mxu0 %v570
        %593 = vmatprep.subr.mxu0 %v573
        %594 = vmatpush1.msra.mxu0 %v572
        %595 = vmatprep.subr.mxu0 0.0
        %596 = vmatpush1.msra.mxu0 0.0
        %597 = vmatprep.subr.mxu0 0.0
        %598 = vmatpush1.msra.mxu0 0.0
        %599 = vmatprep.subr.mxu0 0.0
        %600 = vmatpush1.msra.mxu0 0.0
        %601 = vmatprep.subr.mxu0 0.0
        %602 = vmatpush1.msra.mxu0 0.0
        %603 = vmatprep.subr.mxu0 0.0
        %604 = vmatpush1.msra.mxu0 0.0
        %605 = vmatprep.subr.mxu0 0.0
        %606 = vmatpush1.msra.mxu0 0.0
        %607 = vmatprep.subr.mxu0 0.0
        %608 = vmatpush1.msra.mxu0 0.0
        %609 = vmatprep.subr.mxu0 0.0
        %610 = vmatpush1.msra.mxu0 0.0
        %611 = vmatprep.subr.mxu0 0.0
        %612 = vmatpush1.msra.mxu0 0.0
        %613 = vmatprep.subr.mxu0 0.0
        %614 = vmatpush1.msra.mxu0 0.0
        %615 = vmatprep.subr.mxu0 0.0
        %616 = vmatpush1.msra.mxu0 0.0
        %617 = vmatprep.subr.mxu0 0.0
        %618 = vmatpush1.msra.mxu0 0.0
        %619 = vmatprep.subr.mxu0 0.0
        %620 = vmatpush1.msra.mxu0 0.0
        %621 = vmatprep.subr.mxu0 0.0
        %622 = vmatpush1.msra.mxu0 0.0
        %623 = vmatprep.subr.mxu0 0.0
        %624 = vmatpush1.msra.mxu0 0.0
        %625 = vmatprep.subr.mxu0 0.0
        %626 = vmatpush1.msra.mxu0 0.0
        %627 = vmatprep.subr.mxu0 0.0
        %628 = vmatpush1.msra.mxu0 0.0
        %629 = vmatprep.subr.mxu0 0.0
        %630 = vmatpush1.msra.mxu0 0.0
        %631 = vmatprep.subr.mxu0 0.0
        %632 = vmatpush1.msra.mxu0 0.0
        %633 = vmatprep.subr.mxu0 0.0
        %634 = vmatpush1.msra.mxu0 0.0
        %635 = vmatprep.subr.mxu0 0.0
        %636 = vmatpush1.msra.mxu0 0.0
        %637 = vmatprep.subr.mxu0 0.0
        %638 = vmatpush1.msra.mxu0 0.0
        %639 = vmatprep.subr.mxu0 0.0
        %640 = vmatpush1.msra.mxu0 0.0
        %641 = vmatprep.subr.mxu0 0.0
        %642 = vmatpush1.msra.mxu0 0.0
        %643 = vmatprep.subr.mxu0 0.0
        %644 = vmatpush1.msra.mxu0 0.0
        %645 = vmatprep.subr.mxu0 0.0
        %646 = vmatpush1.msra.mxu0 0.0
        %647 = vmatprep.subr.mxu0 0.0
        %648 = vmatpush1.msra.mxu0 0.0
        %649 = vmatprep.subr.mxu0 0.0
        %650 = vmatpush1.msra.mxu0 0.0
        %651 = vmatprep.subr.mxu0 0.0
        %652 = vmatpush1.msra.mxu0 0.0
        %653 = vmatprep.subr.mxu0 0.0
        %654 = vmatpush1.msra.mxu0 0.0
        %655 = vmatprep.mubr.f32.mxu0 0.0
        %656 = vmatmul.mubr.f32.gmra.mrb[0].mxu0 %v586
        %v657 = vpop.f32.mrb[0].mxu0
        %v658 = vadd.f32 %v579, %v657
        %v659 = vpop.f32.mrb[0].mxu0
        %v660 = vadd.f32 %v579, %v659
        %661 = vmatprep.mubr.f32.mxu0 0.0
        %662 = vmatmul.mubr.f32.gmra.mrb[0].mxu0 %v589
        %v663 = vpop.f32.mrb[0].mxu0
        %v664 = vadd.f32 %v583, %v663
        %v665 = vpop.f32.mrb[0].mxu0
        %v666 = vadd.f32 %v583, %v665
        %667 = vdwg.mxu0
        %v668 = vmax.f32 %v658, 0.0
        %v669 = vmax.f32 %v660, 0.0
        %v670 = vmax.f32 %v664, 0.0
        %v671 = vmax.f32 %v666, 0.0
        %v672 = vld [vmem:[%s3] sm:$0xff]
        %v674 = vsel %vm486, %v672, 0
        %676 = vmatprep.subr.mxu0 %v669
        %677 = vmatpush1.msra.mxu0 %v668
        %678 = vmatprep.subr.mxu0 %v671
        %679 = vmatpush1.msra.mxu0 %v670
        %680 = vmatprep.subr.mxu0 0.0
        %681 = vmatpush1.msra.mxu0 0.0
        %682 = vmatprep.subr.mxu0 0.0
        %683 = vmatpush1.msra.mxu0 0.0
        %684 = vmatprep.subr.mxu0 0.0
        %685 = vmatpush1.msra.mxu0 0.0
        %686 = vmatprep.subr.mxu0 0.0
        %687 = vmatpush1.msra.mxu0 0.0
        %688 = vmatprep.subr.mxu0 0.0
        %689 = vmatpush1.msra.mxu0 0.0
        %690 = vmatprep.subr.mxu0 0.0
        %691 = vmatpush1.msra.mxu0 0.0
        %692 = vmatprep.subr.mxu0 0.0
        %693 = vmatpush1.msra.mxu0 0.0
        %694 = vmatprep.subr.mxu0 0.0
        %695 = vmatpush1.msra.mxu0 0.0
        %696 = vmatprep.subr.mxu0 0.0
        %697 = vmatpush1.msra.mxu0 0.0
        %698 = vmatprep.subr.mxu0 0.0
        %699 = vmatpush1.msra.mxu0 0.0
        %700 = vmatprep.subr.mxu0 0.0
        %701 = vmatpush1.msra.mxu0 0.0
        %702 = vmatprep.subr.mxu0 0.0
        %703 = vmatpush1.msra.mxu0 0.0
        %704 = vmatprep.subr.mxu0 0.0
        %705 = vmatpush1.msra.mxu0 0.0
        %706 = vmatprep.subr.mxu0 0.0
        %707 = vmatpush1.msra.mxu0 0.0
        %708 = vmatprep.subr.mxu0 0.0
        %709 = vmatpush1.msra.mxu0 0.0
        %710 = vmatprep.subr.mxu0 0.0
        %711 = vmatpush1.msra.mxu0 0.0
        %712 = vmatprep.subr.mxu0 0.0
        %713 = vmatpush1.msra.mxu0 0.0
        %714 = vmatprep.subr.mxu0 0.0
        %715 = vmatpush1.msra.mxu0 0.0
        %716 = vmatprep.subr.mxu0 0.0
        %717 = vmatpush1.msra.mxu0 0.0
        %718 = vmatprep.subr.mxu0 0.0
        %719 = vmatpush1.msra.mxu0 0.0
        %720 = vmatprep.subr.mxu0 0.0
        %721 = vmatpush1.msra.mxu0 0.0
        %722 = vmatprep.subr.mxu0 0.0
        %723 = vmatpush1.msra.mxu0 0.0
        %724 = vmatprep.subr.mxu0 0.0
        %725 = vmatpush1.msra.mxu0 0.0
        %726 = vmatprep.subr.mxu0 0.0
        %727 = vmatpush1.msra.mxu0 0.0
        %728 = vmatprep.subr.mxu0 0.0
        %729 = vmatpush1.msra.mxu0 0.0
        %730 = vmatprep.subr.mxu0 0.0
        %731 = vmatpush1.msra.mxu0 0.0
        %732 = vmatprep.subr.mxu0 0.0
        %733 = vmatpush1.msra.mxu0 0.0
        %734 = vmatprep.subr.mxu0 0.0
        %735 = vmatpush1.msra.mxu0 0.0
        %736 = vmatprep.subr.mxu0 0.0
        %737 = vmatpush1.msra.mxu0 0.0
        %738 = vmatprep.subr.mxu0 0.0
        %739 = vmatpush1.msra.mxu0 0.0
        %740 = vmatprep.mubr.f32.mxu0 0.0
        %741 = vmatmul.mubr.f32.gmra.mrb[0].mxu0 %v674
        %v742 = vpop.f32.mrb[0].mxu0
        %v743 = vadd.f32 0.0, %v742
        %v744 = vpop.f32.mrb[0].mxu0
        %v745 = vadd.f32 0.0, %v744
        %746 = vdwg.mxu0
        %748 = vset.pattern.permute.xlu0 3
        %749 = vperm.xlu0 %748, %v279
        %v750 = vpop.permute.xlu0 %749
        %v752 = vadd.f32 %v743, %v750
        %v753 = vadd.f32 %v745, %v750
        %v756 = vcombine.low %v752, %v753
        %v758 = vunpack.c.l.s4 1966171168
        %v759 = vunpack.c.0.s8 %v758
        %v760 = vlaneseq
        %v761 = vshrl.u32 %v760, 7
        %v762 = vsub.s32 %v759, %v761
        %v763 = vrot.slane %v756, %v762
        %v765 = vunpack.c.l.s4 1966171168
        %v766 = vunpack.c.0.s8 %v765
        %v767 = vlaneseq
        %v768 = vshrl.u32 %v767, 7
        %v769 = vsub.s32 %v766, %v768
        %v770 = vrot.slane %v763, %v769
        %v772 = vlaneseq
        %vm773 = vcmp.ge.s32.totalorder %v772, 0
        %vm774 = vcmp.lt.s32.totalorder %v772, 256
        %vm775 = vmand %vm773, %vm774
        %776 = vst.msk [vmem:[%s230] sm:$0x3] %vm775, %v770
        %s777 = sand.u32 %s137, 1
        %s778 = scalar_lea.sflag [#allocation3], %s777
        %s779 = sand.u32 %s137, 1
        %s780 = smul.addr %s779, 2
        %s781 = scalar_lea.vmem [#allocation2], %s780
        // Predicated region
        $region41: #{tpu_custom_call.1} parent=39 // pred_check
          %p782 = pneg %p147
        $region42: #{tpu_custom_call.1} parent=39 // pred_check_branch
          %784 = sbr.rel (%p782) target = $region44
        $region43: #{tpu_custom_call.1} parent=39 // pred_region
          %s786 = ssub.s32 32, 32
          %787 = vsyncadd %s778, %s786
          %s788 = smul.addr %s19, 2
          %s789 = smul.addr %s788, 16
          %s790 = scalar_lea.hbm %s5, %s789
          %s792 = sshll.u32 %s781, 4
          %s793 = int_to_ptr.vmem [resolvable:$true] %s792
          %795 = dma.vmem_to_hbm [thread:$0]  %s793, 32, %s790, %s778
        $region44: #{tpu_custom_call.1} parent=39 // pred_fallthru
          _
      $region40: #{tpu_custom_call.1} parent=5 // pred_fallthru
        _
      %p796 = scmp.le.s32.totalorder 2, %s14
      // Predicated region
      $region45: #{tpu_custom_call.1} parent=5 // pred_check
        %p797 = pneg %p796
      $region46: #{tpu_custom_call.1} parent=5 // pred_check_branch
        %799 = sbr.rel (%p797) target = $region48
      $region47: #{tpu_custom_call.1} parent=5 // pred_region
        %s800 = ssub.s32 %s14, 2
        // Predicated region
        $region49: #{tpu_custom_call.1} parent=47 // pred_check
          %p801 = pneg %p153
        $region50: #{tpu_custom_call.1} parent=47 // pred_check_branch
          %803 = sbr.rel (%p801) target = $region52
        $region51: #{tpu_custom_call.1} parent=47 // pred_region
          %s804 = sand.u32 %s138, 1
          %s805 = scalar_lea.sflag [#allocation3], %s804
          %s806 = sand.u32 %s138, 1
          %s807 = smul.addr %s806, 2
          %s808 = scalar_lea.vmem [#allocation2], %s807
          %809 = dma.done %s805, 32
        $region52: #{tpu_custom_call.1} parent=47 // pred_fallthru
          _
      $region48: #{tpu_custom_call.1} parent=5 // pred_fallthru
        _
    $region6: #{tpu_custom_call.1} parent=1 // loop_footer
      %s18 = sadd.s32 1, %s14
    $region7: #{tpu_custom_call.1} parent=1 // loop_footer_branch
      %13 = sbr.rel target = $region3
    $region8: #{tpu_custom_call.1} parent=1 // loop_exit
      _
    %810 = vsyncpa [#allocation3], 1
    %s811 = scalar_lea.sflag [#allocation3], 1
    %812 = vsyncpa %s811, 1

</llo_original>
